<compile_context>
chip_gen: v7x
topology: tpu7x:2x2x1
jax: 0.10.0
libtpu: 0.0.40
codegen_flags: <defaults>
</compile_context>

<pallas_src>
import functools

import jax
import jax.numpy as jnp
from jax.experimental import pallas as pl
from jax.experimental.pallas import tpu as pltpu

LEAKY_SLOPE = 0.01          # nn.LeakyReLU() default negative_slope
BN_EPS = 1e-5               # nn.BatchNorm2d default eps
_MIB = 1024 * 1024


def _leaky(x):
    return jnp.where(x >= 0, x, LEAKY_SLOPE * x)


# ---------------------------------------------------------------------------
# Hardware-aware knobs
# ---------------------------------------------------------------------------
def _vmem_limit_bytes():
    """~75% of physical VMEM, capped at 96 MiB (v5e/v6e: 128->96, v7x: 64->48)."""
    cap = 64 * _MIB  # safe fallback on any generation
    try:
        info = pltpu.get_tpu_info()
        cap = int(getattr(info, "vmem_capacity_bytes", cap))
    except Exception:
        pass
    return int(min(cap * 3 // 4, 96 * _MIB))


def _pick_tm(m, k, c_out, vmem_limit):
    """Largest M tile (rows of patches) whose double-buffered in/out tiles fit
    a conservative VMEM budget.  Per-grid-step overhead is ~0.35us, so bigger
    is better when VMEM allows (128 MiB chips -> 2048, v7x 64 MiB -> smaller)."""
    tm = 2048 if vmem_limit >= 80 * _MIB else (1024 if vmem_limit >= 48 * _MIB else 512)
    budget = int(0.4 * vmem_limit)
    while tm > 256 and 2 * tm * 2 * (k + c_out) > budget:
        tm //= 2
    if m <= tm:
        return m            # single block == full array dim (always legal)
    return tm               # multiple of 8; ragged last tile is edge-masked


def _resident_spec(shape, nbytes):
    """BlockSpec for a grid-invariant operand.  Large resident weights are
    single-buffered (avoids 2x VMEM for ~hidden_dims=1024 weights on v7x)."""
    if nbytes > 4 * _MIB:
        return pl.BlockSpec(shape, lambda i: (0,) * len(shape),
                            pipeline_mode=pl.Buffered(1))
    return pl.BlockSpec(shape, lambda i: (0,) * len(shape))


# ---------------------------------------------------------------------------
# Pallas kernels
# ---------------------------------------------------------------------------
def _conv_block_kernel(p_ref, w_ref, b_ref, o_ref):
    """o = leaky_relu(p @ w + b).  BN scale is pre-folded into w; b is the
    folded conv-bias + BN shift.  bf16 matmul -> f32 acc, epilogue f32,
    store in o_ref.dtype (bf16 for intermediate layers)."""
    y = jnp.dot(p_ref[...], w_ref[...], preferred_element_type=jnp.float32)
    y = y + b_ref[...]
    o_ref[...] = jnp.where(y >= 0, y, LEAKY_SLOPE * y).astype(o_ref.dtype)


def _conv_fc_kernel(p_ref, w_ref, b_ref, fcw_ref, fcb_ref, o_ref):
    """Last conv block fused with the fc head Sequential(LeakyReLU, Linear).
    Spatial is 1x1 after the conv stack, so the conv output IS the flattened
    feature vector.  leaky(leaky(y)) collapses into a single select."""
    y = jnp.dot(p_ref[...], w_ref[...], preferred_element_type=jnp.float32)
    y = y + b_ref[...]
    f = jnp.where(y >= 0, y, (LEAKY_SLOPE * LEAKY_SLOPE) * y).astype(fcw_ref.dtype)
    o_ref[...] = jnp.dot(f, fcw_ref[...],
                         preferred_element_type=jnp.float32) + fcb_ref[...]


# ---------------------------------------------------------------------------
# Wrappers (pallas_call with unpadded K / C, M-tiled parallel grid)
# ---------------------------------------------------------------------------
def conv_block(patches, w_scaled, bias, *, out_dtype, vmem_limit):
    """leaky_relu(patches @ w_scaled + bias).

    patches:  [M, K]       bf16 (K = 9*C_in, unpadded)
    w_scaled: [K, C_out]   bf16 (BN scale folded in)
    bias:     [1, C_out]   f32  (folded conv bias + BN shift)
    Returns [M, C_out] in `out_dtype`.
    """
    m, k = patches.shape
    c_out = w_scaled.shape[1]
    tm = _pick_tm(m, k, c_out, vmem_limit)
    grid = (pl.cdiv(m, tm),)

    flops = 2 * m * k * c_out
    bytes_accessed = (m * k * patches.dtype.itemsize
                      + k * c_out * w_scaled.dtype.itemsize
                      + c_out * 4
                      + m * c_out * jnp.dtype(out_dtype).itemsize)

    return pl.pallas_call(
        _conv_block_kernel,
        out_shape=jax.ShapeDtypeStruct((m, c_out), out_dtype),
        grid=grid,
        in_specs=[
            pl.BlockSpec((tm, k), lambda i: (i, 0)),
            _resident_spec((k, c_out), k * c_out * w_scaled.dtype.itemsize),
            _resident_spec((1, c_out), c_out * 4),
        ],
        out_specs=pl.BlockSpec((tm, c_out), lambda i: (i, 0)),
        compiler_params=pltpu.CompilerParams(
            dimension_semantics=("parallel",),
            vmem_limit_bytes=vmem_limit),
        cost_estimate=pl.CostEstimate(
            flops=int(flops), transcendentals=0,
            bytes_accessed=int(bytes_accessed)),
    )(patches, w_scaled, bias)


def conv_fc_block(patches, w_scaled, bias, fc_w, fc_b, *, vmem_limit):
    """Fused last conv block + fc head.

    patches [M, K] bf16, w_scaled [K, C] bf16, bias [1, C] f32,
    fc_w [C, O] bf16, fc_b [1, O] f32.  Returns [M, O] f32.
    """
    m, k = patches.shape
    c = w_scaled.shape[1]
    o = fc_w.shape[1]
    tm = _pick_tm(m, k + c, c + o, vmem_limit)
    grid = (pl.cdiv(m, tm),)

    flops = 2 * m * k * c + 2 * m * c * o
    bytes_accessed = (m * k * patches.dtype.itemsize
                      + k * c * w_scaled.dtype.itemsize
                      + c * o * fc_w.dtype.itemsize
                      + c * 4 + o * 4 + m * o * 4)

    return pl.pallas_call(
        _conv_fc_kernel,
        out_shape=jax.ShapeDtypeStruct((m, o), jnp.float32),
        grid=grid,
        in_specs=[
            pl.BlockSpec((tm, k), lambda i: (i, 0)),
            _resident_spec((k, c), k * c * w_scaled.dtype.itemsize),
            _resident_spec((1, c), c * 4),
            _resident_spec((c, o), c * o * fc_w.dtype.itemsize),
            _resident_spec((1, o), o * 4),
        ],
        out_specs=pl.BlockSpec((tm, o), lambda i: (i, 0)),
        compiler_params=pltpu.CompilerParams(
            dimension_semantics=("parallel",),
            vmem_limit_bytes=vmem_limit),
        cost_estimate=pl.CostEstimate(
            flops=int(flops), transcendentals=0,
            bytes_accessed=int(bytes_accessed)),
    )(patches, w_scaled, bias, fc_w, fc_b)


# ---------------------------------------------------------------------------
# Glue: im2col, BN folding, full forward
# ---------------------------------------------------------------------------
def im2col(x_nhwc, ksize=3, stride=2, pad=1):
    """x: [N, H, W, C] -> patches [N*Ho*Wo, ksize*ksize*C], (Ho, Wo).
    Column order is (kh, kw, c), matching an HWIO weight reshaped to (K, C_out)."""
    n, h, w, c = x_nhwc.shape
    xp = jnp.pad(x_nhwc, ((0, 0), (pad, pad), (pad, pad), (0, 0)))
    ho = (h + 2 * pad - ksize) // stride + 1
    wo = (w + 2 * pad - ksize) // stride + 1
    cols = [xp[:, kh:kh + stride * ho:stride, kw:kw + stride * wo:stride, :]
            for kh in range(ksize) for kw in range(ksize)]
    patches = jnp.concatenate(cols, axis=-1)            # [N, Ho, Wo, 9*C]
    return patches.reshape(n * ho * wo, ksize * ksize * c), ho, wo


def _fold_bn_into_conv(layer, compute_dtype):
    """Fold inference-mode BatchNorm into (weight, bias).  Weight is HWIO."""
    c_out = layer["w"].shape[-1]
    k = layer["w"].shape[0] * layer["w"].shape[1] * layer["w"].shape[2]
    inv_std = jax.lax.rsqrt(layer["var"] + BN_EPS)
    scale = layer["gamma"] * inv_std
    w_mat = (layer["w"].reshape(k, c_out) * scale[None, :]).astype(compute_dtype)
    bias = ((layer["b"] - layer["mean"]) * scale + layer["beta"]).astype(jnp.float32)
    return w_mat, bias.reshape(1, c_out)


def classifier_forward(params, x_nchw, *, use_pallas=True,
                       compute_dtype=jnp.bfloat16):
    """Forward matching Classifier.forward (inference-mode BN).  x: [N,C,H,W]."""
    vmem_limit = _vmem_limit_bytes()
    # bf16 BEFORE im2col so the 9x-expanded patch matrix lives in bf16.
    x = jnp.transpose(x_nchw, (0, 2, 3, 1)).astype(compute_dtype)   # -> NHWC
    n = x.shape[0]
    n_layers = len(params["conv"])

    for li, layer in enumerate(params["conv"]):
        w_mat, bias = _fold_bn_into_conv(layer, compute_dtype)
        patches, ho, wo = im2col(x)                                 # [M, 9*C_in]

        if li == n_layers - 1:
            # PyTorch's Linear(hidden_dims[-1], num_outputs) after flatten only
            # matches if the conv stack ends at 1x1 spatial; fail clearly.
            if not (ho == 1 and wo == 1):
                raise ValueError(
                    "Classifier fc head expects the conv stack to reduce the "
                    f"spatial dims to 1x1, got {ho}x{wo}; the PyTorch "
                    "Linear(hidden_dims[-1], num_outputs) would mismatch too.")
            fc_w = params["fc_w"].astype(compute_dtype)
            fc_b = params["fc_b"].reshape(1, -1).astype(jnp.float32)
            if use_pallas:
                return conv_fc_block(patches, w_mat, bias, fc_w, fc_b,
                                     vmem_limit=vmem_limit)
            # pure-JAX reference with matched numerics (same folding / dtypes)
            y = jnp.dot(patches, w_mat, preferred_element_type=jnp.float32) + bias
            f = jnp.where(y >= 0, y,
                          (LEAKY_SLOPE * LEAKY_SLOPE) * y).astype(compute_dtype)
            return jnp.dot(f, fc_w, preferred_element_type=jnp.float32) + fc_b

        if use_pallas:
            y = conv_block(patches, w_mat, bias, out_dtype=compute_dtype,
                           vmem_limit=vmem_limit)
        else:
            y = jnp.dot(patches, w_mat, preferred_element_type=jnp.float32) + bias
            y = _leaky(y).astype(compute_dtype)
        x = y.reshape(n, ho, wo, -1)          # free reshape, already bf16

    raise AssertionError("unreachable: last layer returns")


def classifier_forward_f32_reference(params, x_nchw):
    """Independent full-f32 reference of the PyTorch forward (unfolded BN,
    lax.conv), used as a loose-tolerance parity check of folding/im2col."""
    x = jnp.transpose(x_nchw, (0, 2, 3, 1)).astype(jnp.float32)
    for layer in params["conv"]:
        y = jax.lax.conv_general_dilated(
            x, layer["w"], window_strides=(2, 2), padding=((1, 1), (1, 1)),
            dimension_numbers=("NHWC", "HWIO", "NHWC"))
        y = y + layer["b"]
        y = (y - layer["mean"]) * jax.lax.rsqrt(layer["var"] + BN_EPS)
        y = y * layer["gamma"] + layer["beta"]
        x = _leaky(y)
    flat = x.reshape(x.shape[0], -1)          # 1x1 spatial -> same as NCHW flatten
    return jnp.dot(_leaky(flat), params["fc_w"]) + params["fc_b"]


def init_params(key, in_channels, hidden_dims, num_outputs):
    """Deterministic params.  Conv weights stored HWIO (real PyTorch OIHW
    weights would need a (2,3,1,0) transpose to load here)."""
    params = {"conv": []}
    c_in = in_channels
    for h in hidden_dims:
        key, k1, k2, k3, k4, k5, k6 = jax.random.split(key, 7)
        params["conv"].append({
            "w": jax.random.normal(k1, (3, 3, c_in, h), jnp.float32) * 0.05,
            "b": jax.random.normal(k2, (h,), jnp.float32) * 0.05,
            "gamma": 1.0 + 0.1 * jax.random.normal(k3, (h,), jnp.float32),
            "beta": 0.1 * jax.random.normal(k4, (h,), jnp.float32),
            "mean": 0.1 * jax.random.normal(k5, (h,), jnp.float32),
            "var": jnp.abs(jax.random.normal(k6, (h,), jnp.float32)) + 0.5,
        })
        c_in = h
    key, kf1, kf2 = jax.random.split(key, 3)
    params["fc_w"] = jax.random.normal(kf1, (hidden_dims[-1], num_outputs),
                                       jnp.float32) * 0.05
    params["fc_b"] = jax.random.normal(kf2, (num_outputs,), jnp.float32) * 0.05
    return params


if __name__ == "__main__":
    # Small config: 4 stride-2 conv blocks take 16x16 -> 1x1, so flatten == C_last.
    batch, in_channels, spatial = 2, 4, 16
    hidden_dims = [8, 16, 32, 64]
    num_outputs = 10

    key = jax.random.PRNGKey(0)
    key, kx = jax.random.split(key)
    x = jax.random.normal(kx, (batch, in_channels, spatial, spatial), jnp.float32)
    params = init_params(key, in_channels, hidden_dims, num_outputs)

    fwd = jax.jit(functools.partial(classifier_forward, use_pallas=True))
    fwd_matched = jax.jit(functools.partial(classifier_forward, use_pallas=False))
    fwd_f32 = jax.jit(classifier_forward_f32_reference)

    out = jax.block_until_ready(fwd(params, x))
    ref_matched = jax.block_until_ready(fwd_matched(params, x))
    ref_f32 = jax.block_until_ready(fwd_f32(params, x))

    assert out.shape == (batch, num_outputs), out.shape
    # Matched-numerics reference: validates the Pallas kernels / plumbing.
    err_m = float(jnp.max(jnp.abs(out - ref_matched)))
    assert jnp.allclose(out, ref_matched, atol=5e-3, rtol=5e-3), f"matched err {err_m}"
    # True f32 reference: validates BN folding / im2col / layout (loose tol,
    # the Pallas path runs the big tensors in bf16).
    err_f = float(jnp.max(jnp.abs(out - ref_f32)))
    assert jnp.allclose(out, ref_f32, atol=1e-1, rtol=1e-1), f"f32-ref err {err_f}"

    print("KERNEL_OK")
</pallas_src>

<mosaic_0001>
module attributes {stable_mosaic.version = 11 : i64} {
  func.func @_conv_block_kernel(%arg0: i32, %arg1: memref<128x36xbf16, #tpu.memory_space<vmem>>, %arg2: memref<36x8xbf16, #tpu.memory_space<vmem>>, %arg3: memref<1x8xf32, #tpu.memory_space<vmem>>, %arg4: memref<128x8xbf16, #tpu.memory_space<vmem>>) attributes {dimension_semantics = [#tpu.dimension_semantics<parallel>], iteration_bounds = array<i64: 1>, scalar_prefetch = 0 : i64, scratch_operands = 0 : i64, tpu.core_type = #tpu.core_type<tc>, window_params = [{transform_indices = @transform_0, window_bounds = array<i64: 128, 36>}, {pipeline_mode = #tpu.pipeline_mode<synchronous>, transform_indices = @transform_1, window_bounds = array<i64: 36, 8>}, {pipeline_mode = #tpu.pipeline_mode<synchronous>, transform_indices = @transform_2, window_bounds = array<i64: 1, 8>}, {transform_indices = @transform_3, window_bounds = array<i64: 128, 8>}]} {
    %c0 = arith.constant 0 : index
    %c0_0 = arith.constant 0 : index
    %0 = vector.load %arg1[%c0, %c0_0] : memref<128x36xbf16, #tpu.memory_space<vmem>>, vector<128x36xbf16>
    %c0_1 = arith.constant 0 : index
    %c0_2 = arith.constant 0 : index
    %1 = vector.load %arg2[%c0_1, %c0_2] : memref<36x8xbf16, #tpu.memory_space<vmem>>, vector<36x8xbf16>
    %cst = arith.constant dense<0.000000e+00> : vector<128x8xf32>
    %2 = tpu.matmul %0, %1, %cst {dimension_numbers = #tpu.dot_dimension_numbers<[1], [0], [0], [1], [0, 0, 1, 1], [], []>} : vector<128x36xbf16>, vector<36x8xbf16>, vector<128x8xf32> -> vector<128x8xf32>
    %c0_3 = arith.constant 0 : index
    %c0_4 = arith.constant 0 : index
    %3 = vector.load %arg3[%c0_3, %c0_4] : memref<1x8xf32, #tpu.memory_space<vmem>>, vector<1x8xf32>
    %4 = vector.broadcast %3 : vector<1x8xf32> to vector<128x8xf32>
    %5 = arith.addf %2, %4 : vector<128x8xf32>
    %cst_5 = arith.constant 0.000000e+00 : f32
    %6 = vector.broadcast %cst_5 : f32 to vector<128x8xf32>
    %7 = arith.cmpf oge, %5, %6 : vector<128x8xf32>
    %cst_6 = arith.constant 0.00999999977 : f32
    %8 = vector.broadcast %cst_6 : f32 to vector<128x8xf32>
    %9 = arith.mulf %8, %5 : vector<128x8xf32>
    %10 = arith.select %7, %5, %9 : vector<128x8xi1>, vector<128x8xf32>
    %11 = arith.truncf %10 : vector<128x8xf32> to vector<128x8xbf16>
    %c0_7 = arith.constant 0 : index
    %c0_8 = arith.constant 0 : index
    %12 = vector.load %arg4[%c0_7, %c0_8] : memref<128x8xbf16, #tpu.memory_space<vmem>>, vector<128x8xbf16>
    tpu.vector_store %arg4[%c0_7, %c0_8], %11 {strides = array<i32>} : memref<128x8xbf16, #tpu.memory_space<vmem>>, vector<128x8xbf16>,
    return
  }
  func.func @transform_0(%arg0: i32) -> (i32, i32) {
    %c0_i32 = arith.constant 0 : i32
    %c0_i32_0 = arith.constant 0 : i32
    return %arg0, %c0_i32 : i32, i32
  }
  func.func @transform_1(%arg0: i32) -> (i32, i32) {
    %c0_i32 = arith.constant 0 : i32
    %c0_i32_0 = arith.constant 0 : i32
    %c0_i32_1 = arith.constant 0 : i32
    return %c0_i32, %c0_i32_0 : i32, i32
  }
  func.func @transform_2(%arg0: i32) -> (i32, i32) {
    %c0_i32 = arith.constant 0 : i32
    %c0_i32_0 = arith.constant 0 : i32
    %c0_i32_1 = arith.constant 0 : i32
    return %c0_i32, %c0_i32_0 : i32, i32
  }
  func.func @transform_3(%arg0: i32) -> (i32, i32) {
    %c0_i32 = arith.constant 0 : i32
    %c0_i32_0 = arith.constant 0 : i32
    return %arg0, %c0_i32 : i32, i32
  }
}

module attributes {stable_mosaic.version = 11 : i64} {
  func.func @_conv_block_kernel(%arg0: i32, %arg1: memref<32x72xbf16, #tpu.memory_space<vmem>>, %arg2: memref<72x16xbf16, #tpu.memory_space<vmem>>, %arg3: memref<1x16xf32, #tpu.memory_space<vmem>>, %arg4: memref<32x16xbf16, #tpu.memory_space<vmem>>) attributes {dimension_semantics = [#tpu.dimension_semantics<parallel>], iteration_bounds = array<i64: 1>, scalar_prefetch = 0 : i64, scratch_operands = 0 : i64, tpu.core_type = #tpu.core_type<tc>, window_params = [{transform_indices = @transform_0, window_bounds = array<i64: 32, 72>}, {pipeline_mode = #tpu.pipeline_mode<synchronous>, transform_indices = @transform_1, window_bounds = array<i64: 72, 16>}, {pipeline_mode = #tpu.pipeline_mode<synchronous>, transform_indices = @transform_2, window_bounds = array<i64: 1, 16>}, {transform_indices = @transform_3, window_bounds = array<i64: 32, 16>}]} {
    %c0 = arith.constant 0 : index
    %c0_0 = arith.constant 0 : index
    %0 = vector.load %arg1[%c0, %c0_0] : memref<32x72xbf16, #tpu.memory_space<vmem>>, vector<32x72xbf16>
    %c0_1 = arith.constant 0 : index
    %c0_2 = arith.constant 0 : index
    %1 = vector.load %arg2[%c0_1, %c0_2] : memref<72x16xbf16, #tpu.memory_space<vmem>>, vector<72x16xbf16>
    %cst = arith.constant dense<0.000000e+00> : vector<32x16xf32>
    %2 = tpu.matmul %0, %1, %cst {dimension_numbers = #tpu.dot_dimension_numbers<[1], [0], [0], [1], [0, 0, 1, 1], [], []>} : vector<32x72xbf16>, vector<72x16xbf16>, vector<32x16xf32> -> vector<32x16xf32>
    %c0_3 = arith.constant 0 : index
    %c0_4 = arith.constant 0 : index
    %3 = vector.load %arg3[%c0_3, %c0_4] : memref<1x16xf32, #tpu.memory_space<vmem>>, vector<1x16xf32>
    %4 = vector.broadcast %3 : vector<1x16xf32> to vector<32x16xf32>
    %5 = arith.addf %2, %4 : vector<32x16xf32>
    %cst_5 = arith.constant 0.000000e+00 : f32
    %6 = vector.broadcast %cst_5 : f32 to vector<32x16xf32>
    %7 = arith.cmpf oge, %5, %6 : vector<32x16xf32>
    %cst_6 = arith.constant 0.00999999977 : f32
    %8 = vector.broadcast %cst_6 : f32 to vector<32x16xf32>
    %9 = arith.mulf %8, %5 : vector<32x16xf32>
    %10 = arith.select %7, %5, %9 : vector<32x16xi1>, vector<32x16xf32>
    %11 = arith.truncf %10 : vector<32x16xf32> to vector<32x16xbf16>
    %c0_7 = arith.constant 0 : index
    %c0_8 = arith.constant 0 : index
    %12 = vector.load %arg4[%c0_7, %c0_8] : memref<32x16xbf16, #tpu.memory_space<vmem>>, vector<32x16xbf16>
    tpu.vector_store %arg4[%c0_7, %c0_8], %11 {strides = array<i32>} : memref<32x16xbf16, #tpu.memory_space<vmem>>, vector<32x16xbf16>,
    return
  }
  func.func @transform_0(%arg0: i32) -> (i32, i32) {
    %c0_i32 = arith.constant 0 : i32
    %c0_i32_0 = arith.constant 0 : i32
    return %arg0, %c0_i32 : i32, i32
  }
  func.func @transform_1(%arg0: i32) -> (i32, i32) {
    %c0_i32 = arith.constant 0 : i32
    %c0_i32_0 = arith.constant 0 : i32
    %c0_i32_1 = arith.constant 0 : i32
    return %c0_i32, %c0_i32_0 : i32, i32
  }
  func.func @transform_2(%arg0: i32) -> (i32, i32) {
    %c0_i32 = arith.constant 0 : i32
    %c0_i32_0 = arith.constant 0 : i32
    %c0_i32_1 = arith.constant 0 : i32
    return %c0_i32, %c0_i32_0 : i32, i32
  }
  func.func @transform_3(%arg0: i32) -> (i32, i32) {
    %c0_i32 = arith.constant 0 : i32
    %c0_i32_0 = arith.constant 0 : i32
    return %arg0, %c0_i32 : i32, i32
  }
}

module attributes {stable_mosaic.version = 11 : i64} {
  func.func @_conv_block_kernel(%arg0: i32, %arg1: memref<8x144xbf16, #tpu.memory_space<vmem>>, %arg2: memref<144x32xbf16, #tpu.memory_space<vmem>>, %arg3: memref<1x32xf32, #tpu.memory_space<vmem>>, %arg4: memref<8x32xbf16, #tpu.memory_space<vmem>>) attributes {dimension_semantics = [#tpu.dimension_semantics<parallel>], iteration_bounds = array<i64: 1>, scalar_prefetch = 0 : i64, scratch_operands = 0 : i64, tpu.core_type = #tpu.core_type<tc>, window_params = [{transform_indices = @transform_0, window_bounds = array<i64: 8, 144>}, {pipeline_mode = #tpu.pipeline_mode<synchronous>, transform_indices = @transform_1, window_bounds = array<i64: 144, 32>}, {pipeline_mode = #tpu.pipeline_mode<synchronous>, transform_indices = @transform_2, window_bounds = array<i64: 1, 32>}, {transform_indices = @transform_3, window_bounds = array<i64: 8, 32>}]} {
    %c0 = arith.constant 0 : index
    %c0_0 = arith.constant 0 : index
    %0 = vector.load %arg1[%c0, %c0_0] : memref<8x144xbf16, #tpu.memory_space<vmem>>, vector<8x144xbf16>
    %c0_1 = arith.constant 0 : index
    %c0_2 = arith.constant 0 : index
    %1 = vector.load %arg2[%c0_1, %c0_2] : memref<144x32xbf16, #tpu.memory_space<vmem>>, vector<144x32xbf16>
    %cst = arith.constant dense<0.000000e+00> : vector<8x32xf32>
    %2 = tpu.matmul %0, %1, %cst {dimension_numbers = #tpu.dot_dimension_numbers<[1], [0], [0], [1], [0, 0, 1, 1], [], []>} : vector<8x144xbf16>, vector<144x32xbf16>, vector<8x32xf32> -> vector<8x32xf32>
    %c0_3 = arith.constant 0 : index
    %c0_4 = arith.constant 0 : index
    %3 = vector.load %arg3[%c0_3, %c0_4] : memref<1x32xf32, #tpu.memory_space<vmem>>, vector<1x32xf32>
    %4 = vector.broadcast %3 : vector<1x32xf32> to vector<8x32xf32>
    %5 = arith.addf %2, %4 : vector<8x32xf32>
    %cst_5 = arith.constant 0.000000e+00 : f32
    %6 = vector.broadcast %cst_5 : f32 to vector<8x32xf32>
    %7 = arith.cmpf oge, %5, %6 : vector<8x32xf32>
    %cst_6 = arith.constant 0.00999999977 : f32
    %8 = vector.broadcast %cst_6 : f32 to vector<8x32xf32>
    %9 = arith.mulf %8, %5 : vector<8x32xf32>
    %10 = arith.select %7, %5, %9 : vector<8x32xi1>, vector<8x32xf32>
    %11 = arith.truncf %10 : vector<8x32xf32> to vector<8x32xbf16>
    %c0_7 = arith.constant 0 : index
    %c0_8 = arith.constant 0 : index
    %12 = vector.load %arg4[%c0_7, %c0_8] : memref<8x32xbf16, #tpu.memory_space<vmem>>, vector<8x32xbf16>
    tpu.vector_store %arg4[%c0_7, %c0_8], %11 {strides = array<i32>} : memref<8x32xbf16, #tpu.memory_space<vmem>>, vector<8x32xbf16>,
    return
  }
  func.func @transform_0(%arg0: i32) -> (i32, i32) {
    %c0_i32 = arith.constant 0 : i32
    %c0_i32_0 = arith.constant 0 : i32
    return %arg0, %c0_i32 : i32, i32
  }
  func.func @transform_1(%arg0: i32) -> (i32, i32) {
    %c0_i32 = arith.constant 0 : i32
    %c0_i32_0 = arith.constant 0 : i32
    %c0_i32_1 = arith.constant 0 : i32
    return %c0_i32, %c0_i32_0 : i32, i32
  }
  func.func @transform_2(%arg0: i32) -> (i32, i32) {
    %c0_i32 = arith.constant 0 : i32
    %c0_i32_0 = arith.constant 0 : i32
    %c0_i32_1 = arith.constant 0 : i32
    return %c0_i32, %c0_i32_0 : i32, i32
  }
  func.func @transform_3(%arg0: i32) -> (i32, i32) {
    %c0_i32 = arith.constant 0 : i32
    %c0_i32_0 = arith.constant 0 : i32
    return %arg0, %c0_i32 : i32, i32
  }
}

module attributes {stable_mosaic.version = 11 : i64} {
  func.func @_conv_fc_kernel(%arg0: i32, %arg1: memref<2x288xbf16, #tpu.memory_space<vmem>>, %arg2: memref<288x64xbf16, #tpu.memory_space<vmem>>, %arg3: memref<1x64xf32, #tpu.memory_space<vmem>>, %arg4: memref<64x10xbf16, #tpu.memory_space<vmem>>, %arg5: memref<1x10xf32, #tpu.memory_space<vmem>>, %arg6: memref<2x10xf32, #tpu.memory_space<vmem>>) attributes {dimension_semantics = [#tpu.dimension_semantics<parallel>], iteration_bounds = array<i64: 1>, scalar_prefetch = 0 : i64, scratch_operands = 0 : i64, tpu.core_type = #tpu.core_type<tc>, window_params = [{transform_indices = @transform_0, window_bounds = array<i64: 2, 288>}, {pipeline_mode = #tpu.pipeline_mode<synchronous>, transform_indices = @transform_1, window_bounds = array<i64: 288, 64>}, {pipeline_mode = #tpu.pipeline_mode<synchronous>, transform_indices = @transform_2, window_bounds = array<i64: 1, 64>}, {pipeline_mode = #tpu.pipeline_mode<synchronous>, transform_indices = @transform_3, window_bounds = array<i64: 64, 10>}, {pipeline_mode = #tpu.pipeline_mode<synchronous>, transform_indices = @transform_4, window_bounds = array<i64: 1, 10>}, {transform_indices = @transform_5, window_bounds = array<i64: 2, 10>}]} {
    %c0 = arith.constant 0 : index
    %c0_0 = arith.constant 0 : index
    %0 = vector.load %arg1[%c0, %c0_0] : memref<2x288xbf16, #tpu.memory_space<vmem>>, vector<2x288xbf16>
    %c0_1 = arith.constant 0 : index
    %c0_2 = arith.constant 0 : index
    %1 = vector.load %arg2[%c0_1, %c0_2] : memref<288x64xbf16, #tpu.memory_space<vmem>>, vector<288x64xbf16>
    %cst = arith.constant dense<0.000000e+00> : vector<2x64xf32>
    %2 = tpu.matmul %0, %1, %cst {dimension_numbers = #tpu.dot_dimension_numbers<[1], [0], [0], [1], [0, 0, 1, 1], [], []>} : vector<2x288xbf16>, vector<288x64xbf16>, vector<2x64xf32> -> vector<2x64xf32>
    %c0_3 = arith.constant 0 : index
    %c0_4 = arith.constant 0 : index
    %3 = vector.load %arg3[%c0_3, %c0_4] : memref<1x64xf32, #tpu.memory_space<vmem>>, vector<1x64xf32>
    %4 = vector.broadcast %3 : vector<1x64xf32> to vector<2x64xf32>
    %5 = arith.addf %2, %4 : vector<2x64xf32>
    %cst_5 = arith.constant 0.000000e+00 : f32
    %6 = vector.broadcast %cst_5 : f32 to vector<2x64xf32>
    %7 = arith.cmpf oge, %5, %6 : vector<2x64xf32>
    %cst_6 = arith.constant 9.99999974E-5 : f32
    %8 = vector.broadcast %cst_6 : f32 to vector<2x64xf32>
    %9 = arith.mulf %8, %5 : vector<2x64xf32>
    %10 = arith.select %7, %5, %9 : vector<2x64xi1>, vector<2x64xf32>
    %11 = arith.truncf %10 : vector<2x64xf32> to vector<2x64xbf16>
    %c0_7 = arith.constant 0 : index
    %c0_8 = arith.constant 0 : index
    %12 = vector.load %arg4[%c0_7, %c0_8] : memref<64x10xbf16, #tpu.memory_space<vmem>>, vector<64x10xbf16>
    %cst_9 = arith.constant dense<0.000000e+00> : vector<2x10xf32>
    %13 = tpu.matmul %11, %12, %cst_9 {dimension_numbers = #tpu.dot_dimension_numbers<[1], [0], [0], [1], [0, 0, 1, 1], [], []>} : vector<2x64xbf16>, vector<64x10xbf16>, vector<2x10xf32> -> vector<2x10xf32>
    %c0_10 = arith.constant 0 : index
    %c0_11 = arith.constant 0 : index
    %14 = vector.load %arg5[%c0_10, %c0_11] : memref<1x10xf32, #tpu.memory_space<vmem>>, vector<1x10xf32>
    %15 = vector.broadcast %14 : vector<1x10xf32> to vector<2x10xf32>
    %16 = arith.addf %13, %15 : vector<2x10xf32>
    %c0_12 = arith.constant 0 : index
    %c0_13 = arith.constant 0 : index
    %17 = vector.load %arg6[%c0_12, %c0_13] : memref<2x10xf32, #tpu.memory_space<vmem>>, vector<2x10xf32>
    tpu.vector_store %arg6[%c0_12, %c0_13], %16 {strides = array<i32>} : memref<2x10xf32, #tpu.memory_space<vmem>>, vector<2x10xf32>,
    return
  }
  func.func @transform_0(%arg0: i32) -> (i32, i32) {
    %c0_i32 = arith.constant 0 : i32
    %c0_i32_0 = arith.constant 0 : i32
    return %arg0, %c0_i32 : i32, i32
  }
  func.func @transform_1(%arg0: i32) -> (i32, i32) {
    %c0_i32 = arith.constant 0 : i32
    %c0_i32_0 = arith.constant 0 : i32
    %c0_i32_1 = arith.constant 0 : i32
    return %c0_i32, %c0_i32_0 : i32, i32
  }
  func.func @transform_2(%arg0: i32) -> (i32, i32) {
    %c0_i32 = arith.constant 0 : i32
    %c0_i32_0 = arith.constant 0 : i32
    %c0_i32_1 = arith.constant 0 : i32
    return %c0_i32, %c0_i32_0 : i32, i32
  }
  func.func @transform_3(%arg0: i32) -> (i32, i32) {
    %c0_i32 = arith.constant 0 : i32
    %c0_i32_0 = arith.constant 0 : i32
    %c0_i32_1 = arith.constant 0 : i32
    return %c0_i32, %c0_i32_0 : i32, i32
  }
  func.func @transform_4(%arg0: i32) -> (i32, i32) {
    %c0_i32 = arith.constant 0 : i32
    %c0_i32_0 = arith.constant 0 : i32
    %c0_i32_1 = arith.constant 0 : i32
    return %c0_i32, %c0_i32_0 : i32, i32
  }
  func.func @transform_5(%arg0: i32) -> (i32, i32) {
    %c0_i32 = arith.constant 0 : i32
    %c0_i32_0 = arith.constant 0 : i32
    return %arg0, %c0_i32 : i32, i32
  }
}

</mosaic_0001>

<llo_original>
// kernel: classifier_forward.4
$region0: #{classifier_forward.4}
  #allocation0 [shape = 'u32[]', space=smem, size = 0x4, offset = 0x4, fixed_abs, tag = 'smem constant byte address 0x4 - core index']
  #allocation1 [shape = 'u32[144,128]{1,0:T(1,128)}', space=vmem, size = 0x12000, scoped, tag = 'internal scratch']
  %s0 = inlined_call_operand.vmem [shape: bf16[128,36], index: 0, kind: input, shape index: {}]
  %s1 = inlined_call_operand.vmem [shape: bf16[36,8], index: 1, kind: input, shape index: {}]
  %s2 = inlined_call_operand.vmem [shape: f32[1,8], index: 2, kind: input, shape index: {}]
  %s3 = inlined_call_operand.vmem [shape: bf16[128,8], index: 3, kind: output, shape index: {}]
  %s4 = sld [smem:[#allocation0]]
  $region22: #{classifier_forward.4} parent=0
    _
  %s6 = ssub.s32 1, %s4
  %s7 = scalar_select 0, %s6, %s4
  // Predicated region
  $region2: #{classifier_forward.4} parent=0 // pred_check
    _
  $region3: #{classifier_forward.4} parent=0 // pred_check_branch
    %9 = sbr.rel (0) target = $region5
  $region4: #{classifier_forward.4} parent=0 // pred_region
    _
  $region5: #{classifier_forward.4} parent=0 // pred_fallthru
    _
  // Predicated region
  $region6: #{classifier_forward.4} parent=0 // pred_check
    _
  $region7: #{classifier_forward.4} parent=0 // pred_check_branch
    %11 = sbr.rel (0) target = $region9
  $region8: #{classifier_forward.4} parent=0 // pred_region
    _
  $region9: #{classifier_forward.4} parent=0 // pred_fallthru
    _
  // Predicated region
  $region10: #{classifier_forward.4} parent=0 // pred_check
    _
  $region11: #{classifier_forward.4} parent=0 // pred_check_branch
    %13 = sbr.rel (0) target = $region13
  $region12: #{classifier_forward.4} parent=0 // pred_region
    _
  $region13: #{classifier_forward.4} parent=0 // pred_fallthru
    _
  %v15 = vld [vmem:[%s0] sm:$0xf]
  %v16 = vld [vmem:[%s0 + $0x4] sm:$0xf]
  %v17 = vld [vmem:[%s0 + $0x8] sm:$0xf]
  %v18 = vld [vmem:[%s0 + $0xc] sm:$0xf]
  %v19 = vld [vmem:[%s0 + $0x10] sm:$0xf]
  %v20 = vld [vmem:[%s0 + $0x14] sm:$0xf]
  %v21 = vld [vmem:[%s0 + $0x18] sm:$0xf]
  %v22 = vld [vmem:[%s0 + $0x1c] sm:$0xf]
  %v23 = vld [vmem:[%s0 + $0x20] sm:$0xf]
  %v24 = vld [vmem:[%s0 + $0x24] sm:$0xf]
  %v25 = vld [vmem:[%s0 + $0x28] sm:$0xf]
  %v26 = vld [vmem:[%s0 + $0x2c] sm:$0xf]
  %v27 = vld [vmem:[%s0 + $0x30] sm:$0xf]
  %v28 = vld [vmem:[%s0 + $0x34] sm:$0xf]
  %v29 = vld [vmem:[%s0 + $0x38] sm:$0xf]
  %v30 = vld [vmem:[%s0 + $0x3c] sm:$0xf]
  %v31 = vld [vmem:[%s1] sm:$0xf]
  %v32 = vld [vmem:[%s1 + $0x4] sm:$0xf]
  %v33 = vld [vmem:[%s1 + $0x8] sm:$0xf]
  %v34 = vld [vmem:[%s1 + $0xc] sm:$0xf]
  %v35 = vld [vmem:[%s1 + $0x10] sm:$0x3]
  %v36 = vld [vmem:[%s2] sm:$0x1]
  %v38 = vlaneseq
  %v39 = vshrl.u32 %v38, 7
  %v40 = vsub.s32 0, %v39
  %v41 = vrot.slane %v36, %v40
  %v59 = vunpack.c.l.b16 %v15
  %v60 = vunpack.c.l.b16 %v16
  %v61 = vunpack.c.l.b16 %v17
  %v62 = vunpack.c.l.b16 %v18
  %v63 = vunpack.c.l.b16 %v19
  %v64 = vunpack.c.l.b16 %v20
  %v65 = vunpack.c.l.b16 %v21
  %v66 = vunpack.c.l.b16 %v22
  %v67 = vunpack.c.l.b16 %v23
  %v68 = vunpack.c.l.b16 %v24
  %v69 = vunpack.c.l.b16 %v25
  %v70 = vunpack.c.l.b16 %v26
  %v71 = vunpack.c.l.b16 %v27
  %v72 = vunpack.c.l.b16 %v28
  %v73 = vunpack.c.l.b16 %v29
  %v74 = vunpack.c.l.b16 %v30
  %v75 = vpack.c.b16 %v60, %v59
  %v76 = vpack.c.b16 %v62, %v61
  %v77 = vpack.c.b16 %v64, %v63
  %v78 = vpack.c.b16 %v66, %v65
  %v79 = vpack.c.b16 %v68, %v67
  %v80 = vpack.c.b16 %v70, %v69
  %v81 = vpack.c.b16 %v72, %v71
  %v82 = vpack.c.b16 %v74, %v73
  %v88 = vunpack.c.l.b16 %v31
  %v89 = vunpack.c.l.b16 %v32
  %v90 = vunpack.c.l.b16 %v33
  %v91 = vunpack.c.l.b16 %v34
  %v92 = vunpack.c.l.b16 %v35
  %v93 = vpack.c.b16 %v89, %v88
  %v94 = vpack.c.b16 %v91, %v90
  %v95 = vpack.c.b16 %v92, %v92
  %vm98 = vcmask 293888
  %v100 = vsel %vm98, %v75, 0
  %v103 = vsel %vm98, %v76, 0
  %v106 = vsel %vm98, %v77, 0
  %v109 = vsel %vm98, %v78, 0
  %v112 = vsel %vm98, %v79, 0
  %v115 = vsel %vm98, %v80, 0
  %v118 = vsel %vm98, %v81, 0
  %v121 = vsel %vm98, %v82, 0
  %vm123 = vcmask 1041408
  %v125 = vsel %vm123, %v95, 0
  %127 = vmatprep.subr.bf16.mxu0 0
  %128 = vmatpush1.bf16.msra.mxu0 %v93
  %129 = vmatprep.subr.bf16.mxu0 0
  %130 = vmatpush1.bf16.msra.mxu0 %v94
  %131 = vmatprep.subr.bf16.mxu0 0
  %132 = vmatpush1.bf16.msra.mxu0 %v125
  %133 = vmatprep.subr.bf16.mxu0 0
  %134 = vmatpush1.bf16.msra.mxu0 0
  %135 = vmatprep.subr.bf16.mxu0 0
  %136 = vmatpush1.bf16.msra.mxu0 0
  %137 = vmatprep.subr.bf16.mxu0 0
  %138 = vmatpush1.bf16.msra.mxu0 0
  %139 = vmatprep.subr.bf16.mxu0 0
  %140 = vmatpush1.bf16.msra.mxu0 0
  %141 = vmatprep.subr.bf16.mxu0 0
  %142 = vmatpush1.bf16.msra.mxu0 0
  %143 = vmatprep.subr.bf16.mxu0 0
  %144 = vmatpush1.bf16.msra.mxu0 0
  %145 = vmatprep.subr.bf16.mxu0 0
  %146 = vmatpush1.bf16.msra.mxu0 0
  %147 = vmatprep.subr.bf16.mxu0 0
  %148 = vmatpush1.bf16.msra.mxu0 0
  %149 = vmatprep.subr.bf16.mxu0 0
  %150 = vmatpush1.bf16.msra.mxu0 0
  %151 = vmatprep.subr.bf16.mxu0 0
  %152 = vmatpush1.bf16.msra.mxu0 0
  %153 = vmatprep.subr.bf16.mxu0 0
  %154 = vmatpush1.bf16.msra.mxu0 0
  %155 = vmatprep.subr.bf16.mxu0 0
  %156 = vmatpush1.bf16.msra.mxu0 0
  %157 = vmatprep.subr.bf16.mxu0 0
  %158 = vmatpush1.bf16.msra.mxu0 0
  %159 = vmatprep.mubr.bf16.mxu0 0
  %160 = vmatmul.mubr.bf16.gmra.mrb[0].mxu0 %v100
  %v161 = vpop.f32.mrb[0].mxu0
  %v162 = vadd.f32 %v41, %v161
  %v163 = vpop.f32.mrb[0].mxu0
  %v164 = vpop.f32.mrb[0].mxu0
  %v165 = vadd.f32 %v41, %v164
  %v166 = vpop.f32.mrb[0].mxu0
  %167 = vmatprep.mubr.bf16.mxu0 0
  %168 = vmatmul.mubr.bf16.gmra.mrb[0].mxu0 %v103
  %v169 = vpop.f32.mrb[0].mxu0
  %v170 = vadd.f32 %v41, %v169
  %v171 = vpop.f32.mrb[0].mxu0
  %v172 = vpop.f32.mrb[0].mxu0
  %v173 = vadd.f32 %v41, %v172
  %v174 = vpop.f32.mrb[0].mxu0
  %175 = vmatprep.mubr.bf16.mxu0 0
  %176 = vmatmul.mubr.bf16.gmra.mrb[0].mxu0 %v106
  %v177 = vpop.f32.mrb[0].mxu0
  %v178 = vadd.f32 %v41, %v177
  %v179 = vpop.f32.mrb[0].mxu0
  %v180 = vpop.f32.mrb[0].mxu0
  %v181 = vadd.f32 %v41, %v180
  %v182 = vpop.f32.mrb[0].mxu0
  %183 = vmatprep.mubr.bf16.mxu0 0
  %184 = vmatmul.mubr.bf16.gmra.mrb[0].mxu0 %v109
  %v185 = vpop.f32.mrb[0].mxu0
  %v186 = vadd.f32 %v41, %v185
  %v187 = vpop.f32.mrb[0].mxu0
  %v188 = vpop.f32.mrb[0].mxu0
  %v189 = vadd.f32 %v41, %v188
  %v190 = vpop.f32.mrb[0].mxu0
  %191 = vmatprep.mubr.bf16.mxu0 0
  %192 = vmatmul.mubr.bf16.gmra.mrb[0].mxu0 %v112
  %v193 = vpop.f32.mrb[0].mxu0
  %v194 = vadd.f32 %v41, %v193
  %v195 = vpop.f32.mrb[0].mxu0
  %v196 = vpop.f32.mrb[0].mxu0
  %v197 = vadd.f32 %v41, %v196
  %v198 = vpop.f32.mrb[0].mxu0
  %199 = vmatprep.mubr.bf16.mxu0 0
  %200 = vmatmul.mubr.bf16.gmra.mrb[0].mxu0 %v115
  %v201 = vpop.f32.mrb[0].mxu0
  %v202 = vadd.f32 %v41, %v201
  %v203 = vpop.f32.mrb[0].mxu0
  %v204 = vpop.f32.mrb[0].mxu0
  %v205 = vadd.f32 %v41, %v204
  %v206 = vpop.f32.mrb[0].mxu0
  %207 = vmatprep.mubr.bf16.mxu0 0
  %208 = vmatmul.mubr.bf16.gmra.mrb[0].mxu0 %v118
  %v209 = vpop.f32.mrb[0].mxu0
  %v210 = vadd.f32 %v41, %v209
  %v211 = vpop.f32.mrb[0].mxu0
  %v212 = vpop.f32.mrb[0].mxu0
  %v213 = vadd.f32 %v41, %v212
  %v214 = vpop.f32.mrb[0].mxu0
  %215 = vmatprep.mubr.bf16.mxu0 0
  %216 = vmatmul.mubr.bf16.gmra.mrb[0].mxu0 %v121
  %v217 = vpop.f32.mrb[0].mxu0
  %v218 = vadd.f32 %v41, %v217
  %v219 = vpop.f32.mrb[0].mxu0
  %v220 = vpop.f32.mrb[0].mxu0
  %v221 = vadd.f32 %v41, %v220
  %v222 = vpop.f32.mrb[0].mxu0
  %223 = vdwg.mxu0
  %vm224 = vcmp.ge.f32.partialorder %v162, 0.0
  %vm225 = vcmp.ge.f32.partialorder %v165, 0.0
  %vm226 = vcmp.ge.f32.partialorder %v170, 0.0
  %vm227 = vcmp.ge.f32.partialorder %v173, 0.0
  %vm228 = vcmp.ge.f32.partialorder %v178, 0.0
  %vm229 = vcmp.ge.f32.partialorder %v181, 0.0
  %vm230 = vcmp.ge.f32.partialorder %v186, 0.0
  %vm231 = vcmp.ge.f32.partialorder %v189, 0.0
  %vm232 = vcmp.ge.f32.partialorder %v194, 0.0
  %vm233 = vcmp.ge.f32.partialorder %v197, 0.0
  %vm234 = vcmp.ge.f32.partialorder %v202, 0.0
  %vm235 = vcmp.ge.f32.partialorder %v205, 0.0
  %vm236 = vcmp.ge.f32.partialorder %v210, 0.0
  %vm237 = vcmp.ge.f32.partialorder %v213, 0.0
  %vm238 = vcmp.ge.f32.partialorder %v218, 0.0
  %vm239 = vcmp.ge.f32.partialorder %v221, 0.0
  %v240 = vmul.f32 %v162, 0.01
  %v241 = vmul.f32 %v165, 0.01
  %v242 = vmul.f32 %v170, 0.01
  %v243 = vmul.f32 %v173, 0.01
  %v244 = vmul.f32 %v178, 0.01
  %v245 = vmul.f32 %v181, 0.01
  %v246 = vmul.f32 %v186, 0.01
  %v247 = vmul.f32 %v189, 0.01
  %v248 = vmul.f32 %v194, 0.01
  %v249 = vmul.f32 %v197, 0.01
  %v250 = vmul.f32 %v202, 0.01
  %v251 = vmul.f32 %v205, 0.01
  %v252 = vmul.f32 %v210, 0.01
  %v253 = vmul.f32 %v213, 0.01
  %v254 = vmul.f32 %v218, 0.01
  %v255 = vmul.f32 %v221, 0.01
  %v256 = vsel %vm224, %v162, %v240
  %v257 = vsel %vm225, %v165, %v241
  %v258 = vsel %vm226, %v170, %v242
  %v259 = vsel %vm227, %v173, %v243
  %v260 = vsel %vm228, %v178, %v244
  %v261 = vsel %vm229, %v181, %v245
  %v262 = vsel %vm230, %v186, %v246
  %v263 = vsel %vm231, %v189, %v247
  %v264 = vsel %vm232, %v194, %v248
  %v265 = vsel %vm233, %v197, %v249
  %v266 = vsel %vm234, %v202, %v250
  %v267 = vsel %vm235, %v205, %v251
  %v268 = vsel %vm236, %v210, %v252
  %v269 = vsel %vm237, %v213, %v253
  %v270 = vsel %vm238, %v218, %v254
  %v271 = vsel %vm239, %v221, %v255
  %v272 = vpack.c.bf16 %v257, %v256
  %v273 = vpack.c.bf16 %v259, %v258
  %v274 = vpack.c.bf16 %v261, %v260
  %v275 = vpack.c.bf16 %v263, %v262
  %v276 = vpack.c.bf16 %v265, %v264
  %v277 = vpack.c.bf16 %v267, %v266
  %v278 = vpack.c.bf16 %v269, %v268
  %v279 = vpack.c.bf16 %v271, %v270
  %v288 = vunpack.c.l.b16 %v272
  %v289 = vunpack.c.h.b16 %v272
  %v290 = vunpack.c.l.b16 %v273
  %v291 = vunpack.c.h.b16 %v273
  %v292 = vunpack.c.l.b16 %v274
  %v293 = vunpack.c.h.b16 %v274
  %v294 = vunpack.c.l.b16 %v275
  %v295 = vunpack.c.h.b16 %v275
  %v296 = vunpack.c.l.b16 %v276
  %v297 = vunpack.c.h.b16 %v276
  %v298 = vunpack.c.l.b16 %v277
  %v299 = vunpack.c.h.b16 %v277
  %v300 = vunpack.c.l.b16 %v278
  %v301 = vunpack.c.h.b16 %v278
  %v302 = vunpack.c.l.b16 %v279
  %v303 = vunpack.c.h.b16 %v279
  %v304 = vpack.c.b16 %v288, %v288
  %v305 = vpack.c.b16 %v289, %v289
  %v306 = vpack.c.b16 %v290, %v290
  %v307 = vpack.c.b16 %v291, %v291
  %v308 = vpack.c.b16 %v292, %v292
  %v309 = vpack.c.b16 %v293, %v293
  %v310 = vpack.c.b16 %v294, %v294
  %v311 = vpack.c.b16 %v295, %v295
  %v312 = vpack.c.b16 %v296, %v296
  %v313 = vpack.c.b16 %v297, %v297
  %v314 = vpack.c.b16 %v298, %v298
  %v315 = vpack.c.b16 %v299, %v299
  %v316 = vpack.c.b16 %v300, %v300
  %v317 = vpack.c.b16 %v301, %v301
  %v318 = vpack.c.b16 %v302, %v302
  %v319 = vpack.c.b16 %v303, %v303
  %vm336 = vcmask 60416
  %337 = vst.msk [vmem:[%s3] sm:$0xf] %vm336, %v304
  %338 = vst.msk [vmem:[%s3 + $0x4] sm:$0xf] %vm336, %v305
  %339 = vst.msk [vmem:[%s3 + $0x8] sm:$0xf] %vm336, %v306
  %340 = vst.msk [vmem:[%s3 + $0xc] sm:$0xf] %vm336, %v307
  %341 = vst.msk [vmem:[%s3 + $0x10] sm:$0xf] %vm336, %v308
  %342 = vst.msk [vmem:[%s3 + $0x14] sm:$0xf] %vm336, %v309
  %343 = vst.msk [vmem:[%s3 + $0x18] sm:$0xf] %vm336, %v310
  %344 = vst.msk [vmem:[%s3 + $0x1c] sm:$0xf] %vm336, %v311
  %345 = vst.msk [vmem:[%s3 + $0x20] sm:$0xf] %vm336, %v312
  %346 = vst.msk [vmem:[%s3 + $0x24] sm:$0xf] %vm336, %v313
  %347 = vst.msk [vmem:[%s3 + $0x28] sm:$0xf] %vm336, %v314
  %348 = vst.msk [vmem:[%s3 + $0x2c] sm:$0xf] %vm336, %v315
  %349 = vst.msk [vmem:[%s3 + $0x30] sm:$0xf] %vm336, %v316
  %350 = vst.msk [vmem:[%s3 + $0x34] sm:$0xf] %vm336, %v317
  %351 = vst.msk [vmem:[%s3 + $0x38] sm:$0xf] %vm336, %v318
  %352 = vst.msk [vmem:[%s3 + $0x3c] sm:$0xf] %vm336, %v319
  // Predicated region
  $region14: #{classifier_forward.4} parent=0 // pred_check
    _
  $region15: #{classifier_forward.4} parent=0 // pred_check_branch
    %354 = sbr.rel (0) target = $region17
  $region16: #{classifier_forward.4} parent=0 // pred_region
    _
  $region17: #{classifier_forward.4} parent=0 // pred_fallthru
    _
  // Predicated region
  $region18: #{classifier_forward.4} parent=0 // pred_check
    _
  $region19: #{classifier_forward.4} parent=0 // pred_check_branch
    %356 = sbr.rel (0) target = $region21
  $region20: #{classifier_forward.4} parent=0 // pred_region
    _
  $region21: #{classifier_forward.4} parent=0 // pred_fallthru
    _

// kernel: classifier_forward.5
$region0: #{classifier_forward.5}
  #allocation0 [shape = 'u32[]', space=smem, size = 0x4, offset = 0x4, fixed_abs, tag = 'smem constant byte address 0x4 - core index']
  #allocation1 [shape = 'u32[144,128]{1,0:T(1,128)}', space=vmem, size = 0x12000, scoped, tag = 'internal scratch']
  %s0 = inlined_call_operand.vmem [shape: bf16[32,72], index: 0, kind: input, shape index: {}]
  %s1 = inlined_call_operand.vmem [shape: bf16[72,16], index: 1, kind: input, shape index: {}]
  %s2 = inlined_call_operand.vmem [shape: f32[1,16], index: 2, kind: input, shape index: {}]
  %s3 = inlined_call_operand.vmem [shape: bf16[32,16], index: 3, kind: output, shape index: {}]
  %s4 = sld [smem:[#allocation0]]
  $region22: #{classifier_forward.5} parent=0
    _
  %s6 = ssub.s32 1, %s4
  %s7 = scalar_select 0, %s6, %s4
  // Predicated region
  $region2: #{classifier_forward.5} parent=0 // pred_check
    _
  $region3: #{classifier_forward.5} parent=0 // pred_check_branch
    %9 = sbr.rel (0) target = $region5
  $region4: #{classifier_forward.5} parent=0 // pred_region
    _
  $region5: #{classifier_forward.5} parent=0 // pred_fallthru
    _
  // Predicated region
  $region6: #{classifier_forward.5} parent=0 // pred_check
    _
  $region7: #{classifier_forward.5} parent=0 // pred_check_branch
    %11 = sbr.rel (0) target = $region9
  $region8: #{classifier_forward.5} parent=0 // pred_region
    _
  $region9: #{classifier_forward.5} parent=0 // pred_fallthru
    _
  // Predicated region
  $region10: #{classifier_forward.5} parent=0 // pred_check
    _
  $region11: #{classifier_forward.5} parent=0 // pred_check_branch
    %13 = sbr.rel (0) target = $region13
  $region12: #{classifier_forward.5} parent=0 // pred_region
    _
  $region13: #{classifier_forward.5} parent=0 // pred_fallthru
    _
  %v15 = vld [vmem:[%s0] sm:$0xf]
  %v16 = vld [vmem:[%s0 + $0x4] sm:$0xf]
  %v17 = vld [vmem:[%s0 + $0x8] sm:$0xf]
  %v18 = vld [vmem:[%s0 + $0xc] sm:$0xf]
  %v19 = vld [vmem:[%s1] sm:$0xf]
  %v20 = vld [vmem:[%s1 + $0x4] sm:$0xf]
  %v21 = vld [vmem:[%s1 + $0x8] sm:$0xf]
  %v22 = vld [vmem:[%s1 + $0xc] sm:$0xf]
  %v23 = vld [vmem:[%s1 + $0x10] sm:$0xf]
  %v24 = vld [vmem:[%s1 + $0x14] sm:$0xf]
  %v25 = vld [vmem:[%s1 + $0x18] sm:$0xf]
  %v26 = vld [vmem:[%s1 + $0x1c] sm:$0xf]
  %v27 = vld [vmem:[%s1 + $0x20] sm:$0xf]
  %v28 = vld [vmem:[%s2] sm:$0x1]
  %v30 = vlaneseq
  %v31 = vshrl.u32 %v30, 7
  %v32 = vsub.s32 0, %v31
  %v33 = vrot.slane %v28, %v32
  %v39 = vunpack.c.l.b16 %v15
  %v40 = vunpack.c.l.b16 %v16
  %v41 = vunpack.c.l.b16 %v17
  %v42 = vunpack.c.l.b16 %v18
  %v43 = vpack.c.b16 %v40, %v39
  %v44 = vpack.c.b16 %v42, %v41
  %v54 = vunpack.c.l.b16 %v19
  %v55 = vunpack.c.l.b16 %v20
  %v56 = vunpack.c.l.b16 %v21
  %v57 = vunpack.c.l.b16 %v22
  %v58 = vunpack.c.l.b16 %v23
  %v59 = vunpack.c.l.b16 %v24
  %v60 = vunpack.c.l.b16 %v25
  %v61 = vunpack.c.l.b16 %v26
  %v62 = vunpack.c.l.b16 %v27
  %v63 = vpack.c.b16 %v55, %v54
  %v64 = vpack.c.b16 %v57, %v56
  %v65 = vpack.c.b16 %v59, %v58
  %v66 = vpack.c.b16 %v61, %v60
  %v67 = vpack.c.b16 %v62, %v62
  %vm72 = vcmask 588800
  %v74 = vsel %vm72, %v43, 0
  %v77 = vsel %vm72, %v44, 0
  %vm79 = vcmask 1043456
  %v81 = vsel %vm79, %v67, 0
  %83 = vmatprep.subr.bf16.mxu0 0
  %84 = vmatpush1.bf16.msra.mxu0 %v63
  %85 = vmatprep.subr.bf16.mxu0 0
  %86 = vmatpush1.bf16.msra.mxu0 %v64
  %87 = vmatprep.subr.bf16.mxu0 0
  %88 = vmatpush1.bf16.msra.mxu0 %v65
  %89 = vmatprep.subr.bf16.mxu0 0
  %90 = vmatpush1.bf16.msra.mxu0 %v66
  %91 = vmatprep.subr.bf16.mxu0 0
  %92 = vmatpush1.bf16.msra.mxu0 %v81
  %93 = vmatprep.subr.bf16.mxu0 0
  %94 = vmatpush1.bf16.msra.mxu0 0
  %95 = vmatprep.subr.bf16.mxu0 0
  %96 = vmatpush1.bf16.msra.mxu0 0
  %97 = vmatprep.subr.bf16.mxu0 0
  %98 = vmatpush1.bf16.msra.mxu0 0
  %99 = vmatprep.subr.bf16.mxu0 0
  %100 = vmatpush1.bf16.msra.mxu0 0
  %101 = vmatprep.subr.bf16.mxu0 0
  %102 = vmatpush1.bf16.msra.mxu0 0
  %103 = vmatprep.subr.bf16.mxu0 0
  %104 = vmatpush1.bf16.msra.mxu0 0
  %105 = vmatprep.subr.bf16.mxu0 0
  %106 = vmatpush1.bf16.msra.mxu0 0
  %107 = vmatprep.subr.bf16.mxu0 0
  %108 = vmatpush1.bf16.msra.mxu0 0
  %109 = vmatprep.subr.bf16.mxu0 0
  %110 = vmatpush1.bf16.msra.mxu0 0
  %111 = vmatprep.subr.bf16.mxu0 0
  %112 = vmatpush1.bf16.msra.mxu0 0
  %113 = vmatprep.subr.bf16.mxu0 0
  %114 = vmatpush1.bf16.msra.mxu0 0
  %115 = vmatprep.mubr.bf16.mxu0 0
  %116 = vmatmul.mubr.bf16.gmra.mrb[0].mxu0 %v74
  %v117 = vpop.f32.mrb[0].mxu0
  %v118 = vadd.f32 %v33, %v117
  %v119 = vpop.f32.mrb[0].mxu0
  %v120 = vpop.f32.mrb[0].mxu0
  %v121 = vadd.f32 %v33, %v120
  %v122 = vpop.f32.mrb[0].mxu0
  %123 = vmatprep.mubr.bf16.mxu0 0
  %124 = vmatmul.mubr.bf16.gmra.mrb[0].mxu0 %v77
  %v125 = vpop.f32.mrb[0].mxu0
  %v126 = vadd.f32 %v33, %v125
  %v127 = vpop.f32.mrb[0].mxu0
  %v128 = vpop.f32.mrb[0].mxu0
  %v129 = vadd.f32 %v33, %v128
  %v130 = vpop.f32.mrb[0].mxu0
  %131 = vdwg.mxu0
  %vm132 = vcmp.ge.f32.partialorder %v118, 0.0
  %vm133 = vcmp.ge.f32.partialorder %v121, 0.0
  %vm134 = vcmp.ge.f32.partialorder %v126, 0.0
  %vm135 = vcmp.ge.f32.partialorder %v129, 0.0
  %v136 = vmul.f32 %v118, 0.01
  %v137 = vmul.f32 %v121, 0.01
  %v138 = vmul.f32 %v126, 0.01
  %v139 = vmul.f32 %v129, 0.01
  %v140 = vsel %vm132, %v118, %v136
  %v141 = vsel %vm133, %v121, %v137
  %v142 = vsel %vm134, %v126, %v138
  %v143 = vsel %vm135, %v129, %v139
  %v144 = vpack.c.bf16 %v141, %v140
  %v145 = vpack.c.bf16 %v143, %v142
  %v148 = vunpack.c.l.b16 %v144
  %v149 = vunpack.c.h.b16 %v144
  %v150 = vunpack.c.l.b16 %v145
  %v151 = vunpack.c.h.b16 %v145
  %v152 = vpack.c.b16 %v148, %v148
  %v153 = vpack.c.b16 %v149, %v149
  %v154 = vpack.c.b16 %v150, %v150
  %v155 = vpack.c.b16 %v151, %v151
  %vm160 = vcmask 125952
  %161 = vst.msk [vmem:[%s3] sm:$0xf] %vm160, %v152
  %162 = vst.msk [vmem:[%s3 + $0x4] sm:$0xf] %vm160, %v153
  %163 = vst.msk [vmem:[%s3 + $0x8] sm:$0xf] %vm160, %v154
  %164 = vst.msk [vmem:[%s3 + $0xc] sm:$0xf] %vm160, %v155
  // Predicated region
  $region14: #{classifier_forward.5} parent=0 // pred_check
    _
  $region15: #{classifier_forward.5} parent=0 // pred_check_branch
    %166 = sbr.rel (0) target = $region17
  $region16: #{classifier_forward.5} parent=0 // pred_region
    _
  $region17: #{classifier_forward.5} parent=0 // pred_fallthru
    _
  // Predicated region
  $region18: #{classifier_forward.5} parent=0 // pred_check
    _
  $region19: #{classifier_forward.5} parent=0 // pred_check_branch
    %168 = sbr.rel (0) target = $region21
  $region20: #{classifier_forward.5} parent=0 // pred_region
    _
  $region21: #{classifier_forward.5} parent=0 // pred_fallthru
    _

// kernel: classifier_forward.6
$region0: #{classifier_forward.6}
  #allocation0 [shape = 'u32[]', space=smem, size = 0x4, offset = 0x4, fixed_abs, tag = 'smem constant byte address 0x4 - core index']
  #allocation1 [shape = 'u32[144,128]{1,0:T(1,128)}', space=vmem, size = 0x12000, scoped, tag = 'internal scratch']
  %s0 = inlined_call_operand.vmem [shape: bf16[8,144], index: 0, kind: input, shape index: {}]
  %s1 = inlined_call_operand.vmem [shape: bf16[144,32], index: 1, kind: input, shape index: {}]
  %s2 = inlined_call_operand.vmem [shape: f32[1,32], index: 2, kind: input, shape index: {}]
  %s3 = inlined_call_operand.vmem [shape: bf16[8,32], index: 3, kind: output, shape index: {}]
  %s4 = sld [smem:[#allocation0]]
  $region22: #{classifier_forward.6} parent=0
    _
  %s6 = ssub.s32 1, %s4
  %s7 = scalar_select 0, %s6, %s4
  // Predicated region
  $region2: #{classifier_forward.6} parent=0 // pred_check
    _
  $region3: #{classifier_forward.6} parent=0 // pred_check_branch
    %9 = sbr.rel (0) target = $region5
  $region4: #{classifier_forward.6} parent=0 // pred_region
    _
  $region5: #{classifier_forward.6} parent=0 // pred_fallthru
    _
  // Predicated region
  $region6: #{classifier_forward.6} parent=0 // pred_check
    _
  $region7: #{classifier_forward.6} parent=0 // pred_check_branch
    %11 = sbr.rel (0) target = $region9
  $region8: #{classifier_forward.6} parent=0 // pred_region
    _
  $region9: #{classifier_forward.6} parent=0 // pred_fallthru
    _
  // Predicated region
  $region10: #{classifier_forward.6} parent=0 // pred_check
    _
  $region11: #{classifier_forward.6} parent=0 // pred_check_branch
    %13 = sbr.rel (0) target = $region13
  $region12: #{classifier_forward.6} parent=0 // pred_region
    _
  $region13: #{classifier_forward.6} parent=0 // pred_fallthru
    _
  %v15 = vld [vmem:[%s0] sm:$0xff]
  %v16 = vld [vmem:[%s1] sm:$0xf]
  %v17 = vld [vmem:[%s1 + $0x4] sm:$0xf]
  %v18 = vld [vmem:[%s1 + $0x8] sm:$0xf]
  %v19 = vld [vmem:[%s1 + $0xc] sm:$0xf]
  %v20 = vld [vmem:[%s1 + $0x10] sm:$0xf]
  %v21 = vld [vmem:[%s1 + $0x14] sm:$0xf]
  %v22 = vld [vmem:[%s1 + $0x18] sm:$0xf]
  %v23 = vld [vmem:[%s1 + $0x1c] sm:$0xf]
  %v24 = vld [vmem:[%s1 + $0x20] sm:$0xf]
  %v25 = vld [vmem:[%s1 + $0x24] sm:$0xf]
  %v26 = vld [vmem:[%s1 + $0x28] sm:$0xf]
  %v27 = vld [vmem:[%s1 + $0x2c] sm:$0xf]
  %v28 = vld [vmem:[%s1 + $0x30] sm:$0xf]
  %v29 = vld [vmem:[%s1 + $0x34] sm:$0xf]
  %v30 = vld [vmem:[%s1 + $0x38] sm:$0xf]
  %v31 = vld [vmem:[%s1 + $0x3c] sm:$0xf]
  %v32 = vld [vmem:[%s1 + $0x40] sm:$0xf]
  %v33 = vld [vmem:[%s1 + $0x44] sm:$0xf]
  %v34 = vld [vmem:[%s2] sm:$0x1]
  %v36 = vlaneseq
  %v37 = vshrl.u32 %v36, 7
  %v38 = vsub.s32 0, %v37
  %v39 = vrot.slane %v34, %v38
  %v42 = vunpack.c.l.b16 %v15
  %v43 = vunpack.c.h.b16 %v15
  %v44 = vpack.c.b16 %v42, %v42
  %v45 = vpack.c.b16 %v43, %v43
  %v65 = vunpack.c.l.b16 %v16
  %v66 = vunpack.c.l.b16 %v17
  %v67 = vunpack.c.l.b16 %v18
  %v68 = vunpack.c.l.b16 %v19
  %v69 = vunpack.c.l.b16 %v20
  %v70 = vunpack.c.l.b16 %v21
  %v71 = vunpack.c.l.b16 %v22
  %v72 = vunpack.c.l.b16 %v23
  %v73 = vunpack.c.l.b16 %v24
  %v74 = vunpack.c.l.b16 %v25
  %v75 = vunpack.c.l.b16 %v26
  %v76 = vunpack.c.l.b16 %v27
  %v77 = vunpack.c.l.b16 %v28
  %v78 = vunpack.c.l.b16 %v29
  %v79 = vunpack.c.l.b16 %v30
  %v80 = vunpack.c.l.b16 %v31
  %v81 = vunpack.c.l.b16 %v32
  %v82 = vunpack.c.l.b16 %v33
  %v83 = vpack.c.b16 %v66, %v65
  %v84 = vpack.c.b16 %v68, %v67
  %v85 = vpack.c.b16 %v70, %v69
  %v86 = vpack.c.b16 %v72, %v71
  %v87 = vpack.c.b16 %v74, %v73
  %v88 = vpack.c.b16 %v76, %v75
  %v89 = vpack.c.b16 %v78, %v77
  %v90 = vpack.c.b16 %v80, %v79
  %v91 = vpack.c.b16 %v82, %v81
  %vm101 = vcmask 130048
  %v103 = vsel %vm101, %v45, 0
  %105 = vmatprep.subr.bf16.mxu0 0
  %106 = vmatpush1.bf16.msra.mxu0 %v83
  %107 = vmatprep.subr.bf16.mxu0 0
  %108 = vmatpush1.bf16.msra.mxu0 %v84
  %109 = vmatprep.subr.bf16.mxu0 0
  %110 = vmatpush1.bf16.msra.mxu0 %v85
  %111 = vmatprep.subr.bf16.mxu0 0
  %112 = vmatpush1.bf16.msra.mxu0 %v86
  %113 = vmatprep.subr.bf16.mxu0 0
  %114 = vmatpush1.bf16.msra.mxu0 %v87
  %115 = vmatprep.subr.bf16.mxu0 0
  %116 = vmatpush1.bf16.msra.mxu0 %v88
  %117 = vmatprep.subr.bf16.mxu0 0
  %118 = vmatpush1.bf16.msra.mxu0 %v89
  %119 = vmatprep.subr.bf16.mxu0 0
  %120 = vmatpush1.bf16.msra.mxu0 %v90
  %121 = vmatprep.subr.bf16.mxu0 0
  %122 = vmatpush1.bf16.msra.mxu0 %v91
  %123 = vmatprep.subr.bf16.mxu0 0
  %124 = vmatpush1.bf16.msra.mxu0 0
  %125 = vmatprep.subr.bf16.mxu0 0
  %126 = vmatpush1.bf16.msra.mxu0 0
  %127 = vmatprep.subr.bf16.mxu0 0
  %128 = vmatpush1.bf16.msra.mxu0 0
  %129 = vmatprep.subr.bf16.mxu0 0
  %130 = vmatpush1.bf16.msra.mxu0 0
  %131 = vmatprep.subr.bf16.mxu0 0
  %132 = vmatpush1.bf16.msra.mxu0 0
  %133 = vmatprep.subr.bf16.mxu0 0
  %134 = vmatpush1.bf16.msra.mxu0 0
  %135 = vmatprep.subr.bf16.mxu0 0
  %136 = vmatpush1.bf16.msra.mxu0 0
  %137 = vmatprep.mubr.bf16.mxu0 %v103
  %138 = vmatmul.mubr.bf16.gmra.mrb[0].mxu0 %v44
  %v139 = vpop.f32.mrb[0].mxu0
  %v140 = vadd.f32 %v39, %v139
  %v141 = vpop.f32.mrb[0].mxu0
  %v142 = vpop.f32.mrb[0].mxu0
  %v143 = vpop.f32.mrb[0].mxu0
  %144 = vdwg.mxu0
  %vm145 = vcmp.ge.f32.partialorder %v140, 0.0
  %v146 = vmul.f32 %v140, 0.01
  %v147 = vsel %vm145, %v140, %v146
  %v148 = vpack.c.bf16 %v147, %v147
  %vm149 = vcmask 257024
  %150 = vst.msk [vmem:[%s3] sm:$0xf] %vm149, %v148
  // Predicated region
  $region14: #{classifier_forward.6} parent=0 // pred_check
    _
  $region15: #{classifier_forward.6} parent=0 // pred_check_branch
    %152 = sbr.rel (0) target = $region17
  $region16: #{classifier_forward.6} parent=0 // pred_region
    _
  $region17: #{classifier_forward.6} parent=0 // pred_fallthru
    _
  // Predicated region
  $region18: #{classifier_forward.6} parent=0 // pred_check
    _
  $region19: #{classifier_forward.6} parent=0 // pred_check_branch
    %154 = sbr.rel (0) target = $region21
  $region20: #{classifier_forward.6} parent=0 // pred_region
    _
  $region21: #{classifier_forward.6} parent=0 // pred_fallthru
    _

// kernel: classifier_forward.7
$region0: #{classifier_forward.7}
  #allocation0 [shape = 'u32[]', space=smem, size = 0x4, offset = 0x4, fixed_abs, tag = 'smem constant byte address 0x4 - core index']
  #allocation1 [shape = 'u32[144,128]{1,0:T(1,128)}', space=vmem, size = 0x12000, scoped, tag = 'internal scratch']
  %s0 = inlined_call_operand.vmem [shape: bf16[2,288], index: 0, kind: input, shape index: {}]
  %s1 = inlined_call_operand.vmem [shape: bf16[288,64], index: 1, kind: input, shape index: {}]
  %s2 = inlined_call_operand.vmem [shape: f32[1,64], index: 2, kind: input, shape index: {}]
  %s3 = inlined_call_operand.vmem [shape: bf16[64,10], index: 3, kind: input, shape index: {}]
  %s4 = inlined_call_operand.vmem [shape: f32[1,10], index: 4, kind: input, shape index: {}]
  %s5 = inlined_call_operand.hbm [shape: f32[2,10], index: 5, kind: output, shape index: {}]
  %s6 = sld [smem:[#allocation0]]
  $region30: #{classifier_forward.7} parent=0
    _
  %s8 = ssub.s32 1, %s6
  %s9 = scalar_select 0, %s8, %s6
  $region1: #{classifier_forward.7} parent=0
    #allocation2 [shape = 'u8[1024]{0}', space=vmem, size = 0x400, scoped, tag = 'output window, operand 0, single buffered']
    #allocation3 [shape = 's32[1]{0}', space=sflag, size = 0x4, scoped, tag = 'scoped memory for classifier_forward.7']
    %10 = vsyncpa [#allocation3], 0
    // Predicated region
    $region2: #{classifier_forward.7} parent=1 // pred_check
      _
    $region3: #{classifier_forward.7} parent=1 // pred_check_branch
      %12 = sbr.rel (0) target = $region5
    $region4: #{classifier_forward.7} parent=1 // pred_region
      _
    $region5: #{classifier_forward.7} parent=1 // pred_fallthru
      _
    // Predicated region
    $region6: #{classifier_forward.7} parent=1 // pred_check
      _
    $region7: #{classifier_forward.7} parent=1 // pred_check_branch
      %14 = sbr.rel (0) target = $region9
    $region8: #{classifier_forward.7} parent=1 // pred_region
      _
    $region9: #{classifier_forward.7} parent=1 // pred_fallthru
      _
    // Predicated region
    $region10: #{classifier_forward.7} parent=1 // pred_check
      _
    $region11: #{classifier_forward.7} parent=1 // pred_check_branch
      %16 = sbr.rel (0) target = $region13
    $region12: #{classifier_forward.7} parent=1 // pred_region
      _
    $region13: #{classifier_forward.7} parent=1 // pred_fallthru
      _
    // Predicated region
    $region14: #{classifier_forward.7} parent=1 // pred_check
      _
    $region15: #{classifier_forward.7} parent=1 // pred_check_branch
      %18 = sbr.rel (0) target = $region17
    $region16: #{classifier_forward.7} parent=1 // pred_region
      _
    $region17: #{classifier_forward.7} parent=1 // pred_fallthru
      _
    // Predicated region
    $region18: #{classifier_forward.7} parent=1 // pred_check
      _
    $region19: #{classifier_forward.7} parent=1 // pred_check_branch
      %20 = sbr.rel (0) target = $region21
    $region20: #{classifier_forward.7} parent=1 // pred_region
      _
    $region21: #{classifier_forward.7} parent=1 // pred_fallthru
      _
    %v22 = vld [vmem:[%s0] sm:$0x7]
    %v23 = vld [vmem:[%s1] sm:$0xf]
    %v24 = vld [vmem:[%s1 + $0x4] sm:$0xf]
    %v25 = vld [vmem:[%s1 + $0x8] sm:$0xf]
    %v26 = vld [vmem:[%s1 + $0xc] sm:$0xf]
    %v27 = vld [vmem:[%s1 + $0x10] sm:$0xf]
    %v28 = vld [vmem:[%s1 + $0x14] sm:$0xf]
    %v29 = vld [vmem:[%s1 + $0x18] sm:$0xf]
    %v30 = vld [vmem:[%s1 + $0x1c] sm:$0xf]
    %v31 = vld [vmem:[%s1 + $0x20] sm:$0xf]
    %v32 = vld [vmem:[%s1 + $0x24] sm:$0xf]
    %v33 = vld [vmem:[%s1 + $0x28] sm:$0xf]
    %v34 = vld [vmem:[%s1 + $0x2c] sm:$0xf]
    %v35 = vld [vmem:[%s1 + $0x30] sm:$0xf]
    %v36 = vld [vmem:[%s1 + $0x34] sm:$0xf]
    %v37 = vld [vmem:[%s1 + $0x38] sm:$0xf]
    %v38 = vld [vmem:[%s1 + $0x3c] sm:$0xf]
    %v39 = vld [vmem:[%s1 + $0x40] sm:$0xf]
    %v40 = vld [vmem:[%s1 + $0x44] sm:$0xf]
    %v41 = vld [vmem:[%s1 + $0x48] sm:$0xf]
    %v42 = vld [vmem:[%s1 + $0x4c] sm:$0xf]
    %v43 = vld [vmem:[%s1 + $0x50] sm:$0xf]
    %v44 = vld [vmem:[%s1 + $0x54] sm:$0xf]
    %v45 = vld [vmem:[%s1 + $0x58] sm:$0xf]
    %v46 = vld [vmem:[%s1 + $0x5c] sm:$0xf]
    %v47 = vld [vmem:[%s1 + $0x60] sm:$0xf]
    %v48 = vld [vmem:[%s1 + $0x64] sm:$0xf]
    %v49 = vld [vmem:[%s1 + $0x68] sm:$0xf]
    %v50 = vld [vmem:[%s1 + $0x6c] sm:$0xf]
    %v51 = vld [vmem:[%s1 + $0x70] sm:$0xf]
    %v52 = vld [vmem:[%s1 + $0x74] sm:$0xf]
    %v53 = vld [vmem:[%s1 + $0x78] sm:$0xf]
    %v54 = vld [vmem:[%s1 + $0x7c] sm:$0xf]
    %v55 = vld [vmem:[%s1 + $0x80] sm:$0xf]
    %v56 = vld [vmem:[%s1 + $0x84] sm:$0xf]
    %v57 = vld [vmem:[%s1 + $0x88] sm:$0xf]
    %v58 = vld [vmem:[%s1 + $0x8c] sm:$0xf]
    %v59 = vld [vmem:[%s2] sm:$0x1]
    %v61 = vlaneseq
    %v62 = vshrl.u32 %v61, 7
    %v63 = vsub.s32 0, %v62
    %v64 = vrot.slane %v59, %v63
    %v68 = vunpack.c.l.s4 1966171168
    %v69 = vunpack.c.0.s8 %v68
    %v70 = vlaneseq
    %v71 = vshrl.u32 %v70, 7
    %v72 = vsub.s32 %v69, %v71
    %v73 = vrot.slane %v22, %v72
    %v74 = vcombine.high %v73, %v73
    %v76 = vunpack.c.l.s4 1966171168
    %v77 = vunpack.c.0.s8 %v76
    %v78 = vlaneseq
    %v79 = vshrl.u32 %v78, 7
    %v80 = vsub.s32 %v77, %v79
    %v81 = vrot.slane %v73, %v80
    %v83 = vunpack.c.l.s4 1966171168
    %v84 = vunpack.c.0.s8 %v83
    %v85 = vlaneseq
    %v86 = vshrl.u32 %v85, 7
    %v87 = vsub.s32 %v84, %v86
    %v88 = vrot.slane %v74, %v87
    %v89 = vcombine.high %v81, %v81
    %v128 = vunpack.c.l.b16 %v23
    %v129 = vunpack.c.l.b16 %v24
    %v130 = vunpack.c.l.b16 %v25
    %v131 = vunpack.c.l.b16 %v26
    %v132 = vunpack.c.l.b16 %v27
    %v133 = vunpack.c.l.b16 %v28
    %v134 = vunpack.c.l.b16 %v29
    %v135 = vunpack.c.l.b16 %v30
    %v136 = vunpack.c.l.b16 %v31
    %v137 = vunpack.c.l.b16 %v32
    %v138 = vunpack.c.l.b16 %v33
    %v139 = vunpack.c.l.b16 %v34
    %v140 = vunpack.c.l.b16 %v35
    %v141 = vunpack.c.l.b16 %v36
    %v142 = vunpack.c.l.b16 %v37
    %v143 = vunpack.c.l.b16 %v38
    %v144 = vunpack.c.l.b16 %v39
    %v145 = vunpack.c.l.b16 %v40
    %v146 = vunpack.c.l.b16 %v41
    %v147 = vunpack.c.l.b16 %v42
    %v148 = vunpack.c.l.b16 %v43
    %v149 = vunpack.c.l.b16 %v44
    %v150 = vunpack.c.l.b16 %v45
    %v151 = vunpack.c.l.b16 %v46
    %v152 = vunpack.c.l.b16 %v47
    %v153 = vunpack.c.l.b16 %v48
    %v154 = vunpack.c.l.b16 %v49
    %v155 = vunpack.c.l.b16 %v50
    %v156 = vunpack.c.l.b16 %v51
    %v157 = vunpack.c.l.b16 %v52
    %v158 = vunpack.c.l.b16 %v53
    %v159 = vunpack.c.l.b16 %v54
    %v160 = vunpack.c.l.b16 %v55
    %v161 = vunpack.c.l.b16 %v56
    %v162 = vunpack.c.l.b16 %v57
    %v163 = vunpack.c.l.b16 %v58
    %v164 = vpack.c.b16 %v129, %v128
    %v165 = vpack.c.b16 %v131, %v130
    %v166 = vpack.c.b16 %v133, %v132
    %v167 = vpack.c.b16 %v135, %v134
    %v168 = vpack.c.b16 %v137, %v136
    %v169 = vpack.c.b16 %v139, %v138
    %v170 = vpack.c.b16 %v141, %v140
    %v171 = vpack.c.b16 %v143, %v142
    %v172 = vpack.c.b16 %v145, %v144
    %v173 = vpack.c.b16 %v147, %v146
    %v174 = vpack.c.b16 %v149, %v148
    %v175 = vpack.c.b16 %v151, %v150
    %v176 = vpack.c.b16 %v153, %v152
    %v177 = vpack.c.b16 %v155, %v154
    %v178 = vpack.c.b16 %v157, %v156
    %v179 = vpack.c.b16 %v159, %v158
    %v180 = vpack.c.b16 %v161, %v160
    %v181 = vpack.c.b16 %v163, %v162
    %vm200 = vcmask 261120
    %v202 = vsel %vm200, %v89, 0
    %204 = vmatprep.subr.bf16.mxu0 0
    %205 = vmatpush1.bf16.msra.mxu0 %v164
    %206 = vmatprep.subr.bf16.mxu0 0
    %207 = vmatpush1.bf16.msra.mxu0 %v165
    %208 = vmatprep.subr.bf16.mxu0 0
    %209 = vmatpush1.bf16.msra.mxu0 %v166
    %210 = vmatprep.subr.bf16.mxu0 0
    %211 = vmatpush1.bf16.msra.mxu0 %v167
    %212 = vmatprep.subr.bf16.mxu0 0
    %213 = vmatpush1.bf16.msra.mxu0 %v168
    %214 = vmatprep.subr.bf16.mxu0 0
    %215 = vmatpush1.bf16.msra.mxu0 %v169
    %216 = vmatprep.subr.bf16.mxu0 0
    %217 = vmatpush1.bf16.msra.mxu0 %v170
    %218 = vmatprep.subr.bf16.mxu0 0
    %219 = vmatpush1.bf16.msra.mxu0 %v171
    %220 = vmatprep.subr.bf16.mxu0 0
    %221 = vmatpush1.bf16.msra.mxu0 %v172
    %222 = vmatprep.subr.bf16.mxu0 0
    %223 = vmatpush1.bf16.msra.mxu0 %v173
    %224 = vmatprep.subr.bf16.mxu0 0
    %225 = vmatpush1.bf16.msra.mxu0 %v174
    %226 = vmatprep.subr.bf16.mxu0 0
    %227 = vmatpush1.bf16.msra.mxu0 %v175
    %228 = vmatprep.subr.bf16.mxu0 0
    %229 = vmatpush1.bf16.msra.mxu0 %v176
    %230 = vmatprep.subr.bf16.mxu0 0
    %231 = vmatpush1.bf16.msra.mxu0 %v177
    %232 = vmatprep.subr.bf16.mxu0 0
    %233 = vmatpush1.bf16.msra.mxu0 %v178
    %234 = vmatprep.subr.bf16.mxu0 0
    %235 = vmatpush1.bf16.msra.mxu0 %v179
    %236 = vmatprep.mubr.bf16.mxu0 %v88
    %237 = vmatmul.mubr.bf16.gmra.mrb[0].mxu0 %v81
    %v238 = vpop.f32.mrb[0].mxu0
    %v239 = vadd.f32 %v64, %v238
    %v240 = vpop.f32.mrb[0].mxu0
    %v241 = vpop.f32.mrb[0].mxu0
    %v242 = vpop.f32.mrb[0].mxu0
    %243 = vdwg.mxu0
    %244 = vmatprep.subr.bf16.mxu0 0
    %245 = vmatpush1.bf16.msra.mxu0 %v180
    %246 = vmatprep.subr.bf16.mxu0 0
    %247 = vmatpush1.bf16.msra.mxu0 %v181
    %248 = vmatprep.subr.bf16.mxu0 0
    %249 = vmatpush1.bf16.msra.mxu0 0
    %250 = vmatprep.subr.bf16.mxu0 0
    %251 = vmatpush1.bf16.msra.mxu0 0
    %252 = vmatprep.subr.bf16.mxu0 0
    %253 = vmatpush1.bf16.msra.mxu0 0
    %254 = vmatprep.subr.bf16.mxu0 0
    %255 = vmatpush1.bf16.msra.mxu0 0
    %256 = vmatprep.subr.bf16.mxu0 0
    %257 = vmatpush1.bf16.msra.mxu0 0
    %258 = vmatprep.subr.bf16.mxu0 0
    %259 = vmatpush1.bf16.msra.mxu0 0
    %260 = vmatprep.subr.bf16.mxu0 0
    %261 = vmatpush1.bf16.msra.mxu0 0
    %262 = vmatprep.subr.bf16.mxu0 0
    %263 = vmatpush1.bf16.msra.mxu0 0
    %264 = vmatprep.subr.bf16.mxu0 0
    %265 = vmatpush1.bf16.msra.mxu0 0
    %266 = vmatprep.subr.bf16.mxu0 0
    %267 = vmatpush1.bf16.msra.mxu0 0
    %268 = vmatprep.subr.bf16.mxu0 0
    %269 = vmatpush1.bf16.msra.mxu0 0
    %270 = vmatprep.subr.bf16.mxu0 0
    %271 = vmatpush1.bf16.msra.mxu0 0
    %272 = vmatprep.subr.bf16.mxu0 0
    %273 = vmatpush1.bf16.msra.mxu0 0
    %274 = vmatprep.subr.bf16.mxu0 0
    %275 = vmatpush1.bf16.msra.mxu0 0
    %276 = vmatprep.mubr.bf16.mxu0 0
    %277 = vmatmul.mubr.bf16.gmra.mrb[0].mxu0 %v202
    %v278 = vpop.f32.mrb[0].mxu0
    %v279 = vadd.f32 %v239, %v278
    %v280 = vpop.f32.mrb[0].mxu0
    %v281 = vpop.f32.mrb[0].mxu0
    %v282 = vpop.f32.mrb[0].mxu0
    %283 = vdwg.mxu0
    %vm284 = vcmp.ge.f32.partialorder %v279, 0.0
    %v285 = vmul.f32 %v279, 0.0001
    %v286 = vsel %vm284, %v279, %v285
    %v287 = vpack.c.bf16 %v286, %v286
    %v288 = vld [vmem:[%s3] sm:$0xf]
    %v289 = vld [vmem:[%s3 + $0x4] sm:$0xf]
    %v290 = vld [vmem:[%s3 + $0x8] sm:$0xf]
    %v291 = vld [vmem:[%s3 + $0xc] sm:$0xf]
    %v292 = vld [vmem:[%s3 + $0x10] sm:$0xf]
    %v293 = vld [vmem:[%s3 + $0x14] sm:$0xf]
    %v294 = vld [vmem:[%s3 + $0x18] sm:$0xf]
    %v295 = vld [vmem:[%s3 + $0x1c] sm:$0xf]
    %v296 = vld [vmem:[%s4] sm:$0x1]
    %v298 = vlaneseq
    %v299 = vshrl.u32 %v298, 7
    %v300 = vsub.s32 0, %v299
    %v301 = vrot.slane %v296, %v300
    %v311 = vunpack.c.l.b16 %v288
    %v312 = vunpack.c.l.b16 %v289
    %v313 = vunpack.c.l.b16 %v290
    %v314 = vunpack.c.l.b16 %v291
    %v315 = vunpack.c.l.b16 %v292
    %v316 = vunpack.c.l.b16 %v293
    %v317 = vunpack.c.l.b16 %v294
    %v318 = vunpack.c.l.b16 %v295
    %v319 = vpack.c.b16 %v312, %v311
    %v320 = vpack.c.b16 %v314, %v313
    %v321 = vpack.c.b16 %v316, %v315
    %v322 = vpack.c.b16 %v318, %v317
    %vm327 = vcmask 523264
    %v329 = vsel %vm327, %v287, 0
    %331 = vmatprep.subr.bf16.mxu0 0
    %332 = vmatpush1.bf16.msra.mxu0 %v319
    %333 = vmatprep.subr.bf16.mxu0 0
    %334 = vmatpush1.bf16.msra.mxu0 %v320
    %335 = vmatprep.subr.bf16.mxu0 0
    %336 = vmatpush1.bf16.msra.mxu0 %v321
    %337 = vmatprep.subr.bf16.mxu0 0
    %338 = vmatpush1.bf16.msra.mxu0 %v322
    %339 = vmatprep.subr.bf16.mxu0 0
    %340 = vmatpush1.bf16.msra.mxu0 0
    %341 = vmatprep.subr.bf16.mxu0 0
    %342 = vmatpush1.bf16.msra.mxu0 0
    %343 = vmatprep.subr.bf16.mxu0 0
    %344 = vmatpush1.bf16.msra.mxu0 0
    %345 = vmatprep.subr.bf16.mxu0 0
    %346 = vmatpush1.bf16.msra.mxu0 0
    %347 = vmatprep.subr.bf16.mxu0 0
    %348 = vmatpush1.bf16.msra.mxu0 0
    %349 = vmatprep.subr.bf16.mxu0 0
    %350 = vmatpush1.bf16.msra.mxu0 0
    %351 = vmatprep.subr.bf16.mxu0 0
    %352 = vmatpush1.bf16.msra.mxu0 0
    %353 = vmatprep.subr.bf16.mxu0 0
    %354 = vmatpush1.bf16.msra.mxu0 0
    %355 = vmatprep.subr.bf16.mxu0 0
    %356 = vmatpush1.bf16.msra.mxu0 0
    %357 = vmatprep.subr.bf16.mxu0 0
    %358 = vmatpush1.bf16.msra.mxu0 0
    %359 = vmatprep.subr.bf16.mxu0 0
    %360 = vmatpush1.bf16.msra.mxu0 0
    %361 = vmatprep.subr.bf16.mxu0 0
    %362 = vmatpush1.bf16.msra.mxu0 0
    %363 = vmatprep.mubr.bf16.mxu0 0
    %364 = vmatmul.mubr.bf16.gmra.mrb[0].mxu0 %v329
    %v365 = vpop.f32.mrb[0].mxu0
    %v366 = vadd.f32 %v301, %v365
    %v367 = vpop.f32.mrb[0].mxu0
    %v368 = vpop.f32.mrb[0].mxu0
    %v369 = vpop.f32.mrb[0].mxu0
    %370 = vdwg.mxu0
    %vm371 = vcmask 74752
    %372 = vst.msk [vmem:[#allocation2] sm:$0x3] %vm371, %v366
    // Predicated region
    $region22: #{classifier_forward.7} parent=1 // pred_check
      _
    $region23: #{classifier_forward.7} parent=1 // pred_check_branch
      %374 = sbr.rel (0) target = $region25
    $region24: #{classifier_forward.7} parent=1 // pred_region
      %s376 = ssub.s32 32, 32
      %377 = vsyncadd [#allocation3], %s376
      %s379 = sshll.u32 [#allocation2], 4
      %s380 = int_to_ptr.vmem [resolvable:$true] %s379
      %382 = dma.vmem_to_hbm [thread:$0]  %s380, 32, %s5, [#allocation3]
    $region25: #{classifier_forward.7} parent=1 // pred_fallthru
      _
    // Predicated region
    $region26: #{classifier_forward.7} parent=1 // pred_check
      _
    $region27: #{classifier_forward.7} parent=1 // pred_check_branch
      %384 = sbr.rel (0) target = $region29
    $region28: #{classifier_forward.7} parent=1 // pred_region
      %385 = dma.done [#allocation3], 32
    $region29: #{classifier_forward.7} parent=1 // pred_fallthru
      _
    %386 = vsyncpa [#allocation3], 1

</llo_original>
